<compile_context>
chip_gen: v5e
topology: v5e:2x2
jax: 0.10.0
libtpu: 0.0.40
codegen_flags: <defaults>
</compile_context>

<pallas_src>
import functools

import jax
import jax.numpy as jnp
import numpy as np
from jax.experimental import pallas as pl
from jax.experimental.pallas import tpu as pltpu


def _hausdorff_kernel(d2_ref, pred_ref, targ_ref, pfg_col_ref, tfg_col_ref,
                      out_ref, *, alpha):
    """One grid step = one batch element -> one (1, 1) partial-sum output."""
    # Sentinel >> max possible squared distance for supported spatial sizes.
    BIG = jnp.float32(1e9)

    d2 = d2_ref[...]            # (N, N) pairwise squared distances (symmetric)
    pred = pred_ref[...]        # (1, N) float32
    targ = targ_ref[...]        # (1, N) float32

    def min_sq_opposite(img_row, fg_col):
        # img_row: (1, N) image values; fg_col: (N, 1) {0,1} foreground mask.
        fg_row = (img_row > 0.5).astype(jnp.float32)             # (1, N)
        opp = fg_col != fg_row                                   # (N, N) bool
        masked = jnp.where(opp, d2, BIG)                         # one vsel/elem
        min_sq = jnp.min(masked, axis=0, keepdims=True)          # (1, N) lane-dense
        any_fg = jnp.max(fg_row, axis=1, keepdims=True)          # (1, 1)
        # Reference zeroes the field when the image has no foreground at all.
        # TODO(synk): all-foreground (empty-background) images stay at the BIG
        # sentinel instead of reproducing scipy edt's corner-case behaviour.
        return min_sq * any_fg                                   # (1, N) == dt**2

    p_sq = min_sq_opposite(pred, pfg_col_ref[...])
    t_sq = min_sq_opposite(targ, tfg_col_ref[...])

    if alpha == 2.0:
        # dt**2 is exactly the squared min distance: no sqrt / no re-squaring.
        distance = p_sq + t_sq
    else:
        half = 0.5 * float(alpha)
        distance = jnp.power(p_sq, half) + jnp.power(t_sq, half)

    err = (pred - targ) ** 2                                     # (1, N)
    out_ref[...] = jnp.sum(err * distance, axis=1, keepdims=True)  # (1, 1)


def _hausdorff_dt_loss_impl(pred, target, alpha):
    B, C, H, W = pred.shape
    assert C == 1, "HausdorffDTLoss uses a single binary channel"
    N = H * W
    # TODO(synk): for spatial grids beyond ~32x32 the (N,N) matrix outgrows
    # VMEM; the q axis should then be tiled with a running-min scratch.

    pred_f = jnp.asarray(pred, jnp.float32).reshape(B, 1, N)
    targ_f = jnp.asarray(target, jnp.float32).reshape(B, 1, N)
    # Foreground masks in column layout (same row-major bytes, metadata only).
    pred_fg_col = (pred_f > 0.5).astype(jnp.float32).reshape(B, N, 1)
    targ_fg_col = (targ_f > 0.5).astype(jnp.float32).reshape(B, N, 1)

    # Batch-invariant pairwise squared-distance matrix, built once on the host
    # (baked as a constant under jit; no per-grid-step int div/mod or iota work
    # inside the kernel).
    idx = np.arange(N, dtype=np.int32)
    r = (idx // W).astype(np.float32)
    c = (idx % W).astype(np.float32)
    d2_np = (r[:, None] - r[None, :]) ** 2 + (c[:, None] - c[None, :]) ** 2
    d2 = jnp.asarray(d2_np, jnp.float32)                         # (N, N)

    kernel = functools.partial(_hausdorff_kernel, alpha=float(alpha))

    partials = pl.pallas_call(
        kernel,
        out_shape=jax.ShapeDtypeStruct((B, 1, 1), jnp.float32),
        grid_spec=pltpu.PrefetchScalarGridSpec(
            num_scalar_prefetch=0,
            grid=(B,),
            in_specs=[
                # Constant index_map -> d2 stays resident across the grid.
                pl.BlockSpec((N, N), lambda b: (0, 0)),
                # Leading batch dim squeezed out of the kernel view.
                pl.BlockSpec((None, 1, N), lambda b: (b, 0, 0)),
                pl.BlockSpec((None, 1, N), lambda b: (b, 0, 0)),
                pl.BlockSpec((None, N, 1), lambda b: (b, 0, 0)),
                pl.BlockSpec((None, N, 1), lambda b: (b, 0, 0)),
            ],
            out_specs=pl.BlockSpec((None, 1, 1), lambda b: (b, 0, 0)),
        ),
        compiler_params=pltpu.CompilerParams(
            # Independent per-batch outputs -> shard batch axis across cores.
            dimension_semantics=("parallel",),
        ),
    )(d2, pred_f, targ_f, pred_fg_col, targ_fg_col)

    count = B * C * H * W
    return jnp.sum(partials) * jnp.float32(1.0 / count)


@functools.partial(jax.jit, static_argnames=("alpha",))
def hausdorff_dt_loss(pred, target, alpha=2.0):
    """pred, target: (B, 1, H, W) float. Returns scalar float32 loss."""
    return _hausdorff_dt_loss_impl(pred, target, alpha)


def _reference_loss(pred, target, alpha=2.0):
    """Pure numpy reference (brute-force exact EDT), mirrors the PyTorch module."""
    pred = np.asarray(pred, np.float64)
    target = np.asarray(target, np.float64)
    B, _, H, W = pred.shape

    coords = np.stack(
        np.meshgrid(np.arange(H), np.arange(W), indexing="ij"), axis=-1
    ).reshape(-1, 2).astype(np.float64)
    d2 = ((coords[:, None, :] - coords[None, :, :]) ** 2).sum(-1)  # (N, N)

    def dist_field(img):
        field = np.zeros_like(img)
        for b in range(B):
            fg = img[b, 0] > 0.5
            if fg.any():
                fgf = fg.reshape(-1)
                to_bg = np.sqrt(np.min(np.where(fgf[None, :], np.inf, d2), axis=1))
                to_fg = np.sqrt(np.min(np.where(fgf[None, :], d2, np.inf), axis=1))
                field[b, 0] = (to_bg + to_fg).reshape(H, W)
        return field

    pred_dt = dist_field(pred)
    targ_dt = dist_field(target)
    err = (pred - target) ** 2
    distance = pred_dt ** alpha + targ_dt ** alpha
    return (err * distance).mean()


if __name__ == "__main__":
    key = jax.random.PRNGKey(0)
    k1, k2 = jax.random.split(key)
    # pred: soft probabilities in [0,1]; target: binary mask (both classes present)
    pred = jax.random.uniform(k1, (2, 1, 16, 16), dtype=jnp.float32)
    target = (jax.random.uniform(k2, (2, 1, 16, 16)) > 0.5).astype(jnp.float32)

    loss = jax.block_until_ready(hausdorff_dt_loss(pred, target, alpha=2.0))

    ref = _reference_loss(np.asarray(pred), np.asarray(target), alpha=2.0)
    np.testing.assert_allclose(float(loss), float(ref), rtol=2e-3, atol=1e-3)

    print("KERNEL_OK")
</pallas_src>

<mosaic_0001>
module attributes {stable_mosaic.version = 11 : i64} {
  func.func @_hausdorff_kernel(%arg0: i32, %arg1: memref<256x256xf32, #tpu.memory_space<vmem>>, %arg2: memref<1x1x256xf32, #tpu.memory_space<vmem>>, %arg3: memref<1x1x256xf32, #tpu.memory_space<vmem>>, %arg4: memref<1x256x1xf32, #tpu.memory_space<vmem>>, %arg5: memref<1x256x1xf32, #tpu.memory_space<vmem>>, %arg6: memref<1x1x1xf32, #tpu.memory_space<vmem>>) attributes {dimension_semantics = [#tpu.dimension_semantics<parallel>], iteration_bounds = array<i64: 2>, scalar_prefetch = 0 : i64, scratch_operands = 0 : i64, tpu.core_type = #tpu.core_type<tc>, window_params = [{pipeline_mode = #tpu.pipeline_mode<synchronous>, transform_indices = @transform_0, window_bounds = array<i64: 256, 256>}, {transform_indices = @transform_1, window_bounds = array<i64: 1, 1, 256>}, {transform_indices = @transform_2, window_bounds = array<i64: 1, 1, 256>}, {transform_indices = @transform_3, window_bounds = array<i64: 1, 256, 1>}, {transform_indices = @transform_4, window_bounds = array<i64: 1, 256, 1>}, {transform_indices = @transform_5, window_bounds = array<i64: 1, 1, 1>}]} {
    %c0 = arith.constant 0 : index
    %c0_0 = arith.constant 0 : index
    %0 = vector.load %arg1[%c0, %c0_0] : memref<256x256xf32, #tpu.memory_space<vmem>>, vector<256x256xf32>
    %c0_1 = arith.constant 0 : index
    %c0_2 = arith.constant 0 : index
    %c0_3 = arith.constant 0 : index
    %1 = vector.load %arg2[%c0_1, %c0_2, %c0_3] : memref<1x1x256xf32, #tpu.memory_space<vmem>>, vector<1x1x256xf32>
    %2 = vector.shape_cast %1 : vector<1x1x256xf32> to vector<1x256xf32>
    %c0_4 = arith.constant 0 : index
    %c0_5 = arith.constant 0 : index
    %c0_6 = arith.constant 0 : index
    %3 = vector.load %arg3[%c0_4, %c0_5, %c0_6] : memref<1x1x256xf32, #tpu.memory_space<vmem>>, vector<1x1x256xf32>
    %4 = vector.shape_cast %3 : vector<1x1x256xf32> to vector<1x256xf32>
    %c0_7 = arith.constant 0 : index
    %c0_8 = arith.constant 0 : index
    %c0_9 = arith.constant 0 : index
    %5 = vector.load %arg4[%c0_7, %c0_8, %c0_9] : memref<1x256x1xf32, #tpu.memory_space<vmem>>, vector<1x256x1xf32>
    %6 = vector.shape_cast %5 : vector<1x256x1xf32> to vector<256x1xf32>
    %cst = arith.constant 5.000000e-01 : f32
    %7 = vector.broadcast %cst : f32 to vector<1x256xf32>
    %8 = arith.cmpf ogt, %2, %7 : vector<1x256xf32>
    %9 = arith.extui %8 : vector<1x256xi1> to vector<1x256xi32>
    %10 = arith.sitofp %9 : vector<1x256xi32> to vector<1x256xf32>
    %11 = vector.broadcast %6 : vector<256x1xf32> to vector<256x256xf32>
    %12 = vector.broadcast %10 : vector<1x256xf32> to vector<256x256xf32>
    %13 = arith.cmpf one, %11, %12 : vector<256x256xf32>
    %cst_10 = arith.constant 1.000000e+09 : f32
    %14 = vector.broadcast %cst_10 : f32 to vector<256x256xf32>
    %15 = arith.select %13, %0, %14 : vector<256x256xi1>, vector<256x256xf32>
    %cst_11 = arith.constant dense<0x7F800000> : vector<256xf32>
    %16 = vector.multi_reduction <minimumf>, %15, %cst_11 [0] : vector<256x256xf32> to vector<256xf32>
    %17 = vector.shape_cast %16 : vector<256xf32> to vector<1x256xf32>
    %cst_12 = arith.constant dense<0xFF800000> : vector<1xf32>
    %18 = vector.multi_reduction <maximumf>, %10, %cst_12 [1] : vector<1x256xf32> to vector<1xf32>
    %19 = vector.shape_cast %18 : vector<1xf32> to vector<1x1xf32>
    %20 = vector.broadcast %19 : vector<1x1xf32> to vector<1x256xf32>
    %21 = arith.mulf %17, %20 : vector<1x256xf32>
    %c0_13 = arith.constant 0 : index
    %c0_14 = arith.constant 0 : index
    %c0_15 = arith.constant 0 : index
    %22 = vector.load %arg5[%c0_13, %c0_14, %c0_15] : memref<1x256x1xf32, #tpu.memory_space<vmem>>, vector<1x256x1xf32>
    %23 = vector.shape_cast %22 : vector<1x256x1xf32> to vector<256x1xf32>
    %cst_16 = arith.constant 5.000000e-01 : f32
    %24 = vector.broadcast %cst_16 : f32 to vector<1x256xf32>
    %25 = arith.cmpf ogt, %4, %24 : vector<1x256xf32>
    %26 = arith.extui %25 : vector<1x256xi1> to vector<1x256xi32>
    %27 = arith.sitofp %26 : vector<1x256xi32> to vector<1x256xf32>
    %28 = vector.broadcast %23 : vector<256x1xf32> to vector<256x256xf32>
    %29 = vector.broadcast %27 : vector<1x256xf32> to vector<256x256xf32>
    %30 = arith.cmpf one, %28, %29 : vector<256x256xf32>
    %cst_17 = arith.constant 1.000000e+09 : f32
    %31 = vector.broadcast %cst_17 : f32 to vector<256x256xf32>
    %32 = arith.select %30, %0, %31 : vector<256x256xi1>, vector<256x256xf32>
    %cst_18 = arith.constant dense<0x7F800000> : vector<256xf32>
    %33 = vector.multi_reduction <minimumf>, %32, %cst_18 [0] : vector<256x256xf32> to vector<256xf32>
    %34 = vector.shape_cast %33 : vector<256xf32> to vector<1x256xf32>
    %cst_19 = arith.constant dense<0xFF800000> : vector<1xf32>
    %35 = vector.multi_reduction <maximumf>, %27, %cst_19 [1] : vector<1x256xf32> to vector<1xf32>
    %36 = vector.shape_cast %35 : vector<1xf32> to vector<1x1xf32>
    %37 = vector.broadcast %36 : vector<1x1xf32> to vector<1x256xf32>
    %38 = arith.mulf %34, %37 : vector<1x256xf32>
    %39 = arith.addf %21, %38 : vector<1x256xf32>
    %40 = arith.subf %2, %4 : vector<1x256xf32>
    %41 = arith.mulf %40, %40 : vector<1x256xf32>
    %42 = arith.mulf %41, %39 : vector<1x256xf32>
    %cst_20 = arith.constant dense<0.000000e+00> : vector<1xf32>
    %43 = vector.multi_reduction <add>, %42, %cst_20 [1] : vector<1x256xf32> to vector<1xf32>
    %44 = vector.shape_cast %43 : vector<1xf32> to vector<1x1xf32>
    %c0_21 = arith.constant 0 : index
    %c0_22 = arith.constant 0 : index
    %c0_23 = arith.constant 0 : index
    %45 = vector.load %arg6[%c0_21, %c0_22, %c0_23] : memref<1x1x1xf32, #tpu.memory_space<vmem>>, vector<1x1x1xf32>
    %46 = vector.shape_cast %45 : vector<1x1x1xf32> to vector<1x1xf32>
    %47 = vector.shape_cast %44 : vector<1x1xf32> to vector<1x1x1xf32>
    tpu.vector_store %arg6[%c0_21, %c0_22, %c0_23], %47 {strides = array<i32>} : memref<1x1x1xf32, #tpu.memory_space<vmem>>, vector<1x1x1xf32>,
    return
  }
  func.func @transform_0(%arg0: i32) -> (i32, i32) {
    %c0_i32 = arith.constant 0 : i32
    %c0_i32_0 = arith.constant 0 : i32
    %c0_i32_1 = arith.constant 0 : i32
    return %c0_i32, %c0_i32_0 : i32, i32
  }
  func.func @transform_1(%arg0: i32) -> (i32, i32, i32) {
    %c0_i32 = arith.constant 0 : i32
    %c0_i32_0 = arith.constant 0 : i32
    %c0_i32_1 = arith.constant 0 : i32
    return %arg0, %c0_i32, %c0_i32_0 : i32, i32, i32
  }
  func.func @transform_2(%arg0: i32) -> (i32, i32, i32) {
    %c0_i32 = arith.constant 0 : i32
    %c0_i32_0 = arith.constant 0 : i32
    %c0_i32_1 = arith.constant 0 : i32
    return %arg0, %c0_i32, %c0_i32_0 : i32, i32, i32
  }
  func.func @transform_3(%arg0: i32) -> (i32, i32, i32) {
    %c0_i32 = arith.constant 0 : i32
    %c0_i32_0 = arith.constant 0 : i32
    %c0_i32_1 = arith.constant 0 : i32
    return %arg0, %c0_i32, %c0_i32_0 : i32, i32, i32
  }
  func.func @transform_4(%arg0: i32) -> (i32, i32, i32) {
    %c0_i32 = arith.constant 0 : i32
    %c0_i32_0 = arith.constant 0 : i32
    %c0_i32_1 = arith.constant 0 : i32
    return %arg0, %c0_i32, %c0_i32_0 : i32, i32, i32
  }
  func.func @transform_5(%arg0: i32) -> (i32, i32, i32) {
    %c0_i32 = arith.constant 0 : i32
    %c0_i32_0 = arith.constant 0 : i32
    %c0_i32_1 = arith.constant 0 : i32
    return %arg0, %c0_i32, %c0_i32_0 : i32, i32, i32
  }
}

</mosaic_0001>

<llo_original>
// kernel: hausdorff_dt_loss.1
$region0: #{hausdorff_dt_loss.1}
  #allocation0 [shape = 'u32[]', space=smem, size = 0x4, offset = 0x4, fixed_abs, tag = 'smem constant byte address 0x4 - core index']
  #allocation1 [shape = 'u32[72,128]{1,0:T(1,128)}', space=vmem, size = 0x9000, scoped, tag = 'internal scratch']
  %s0 = inlined_call_operand.vmem [shape: f32[256,256], index: 0, kind: input, shape index: {}]
  %s1 = inlined_call_operand.vmem [shape: f32[2,1,256], index: 1, kind: input, shape index: {}]
  %s2 = inlined_call_operand.vmem [shape: f32[2,1,256], index: 2, kind: input, shape index: {}]
  %s3 = inlined_call_operand.vmem [shape: f32[2,256,1], index: 3, kind: input, shape index: {}]
  %s4 = inlined_call_operand.vmem [shape: f32[2,256,1], index: 4, kind: input, shape index: {}]
  %s5 = inlined_call_operand.vmem [shape: f32[2,1,1], index: 5, kind: output, shape index: {}]
  %s6 = sld [smem:[#allocation0]]
  $region53: #{hausdorff_dt_loss.1} parent=0
    _
  %s8 = ssub.s32 1, %s6
  %s9 = scalar_select 0, %s8, %s6
  loop: start=0, step=1, limit=4
  $region2: #{hausdorff_dt_loss.1} parent=0 // loop_pre_header
    _
  $region3: #{hausdorff_dt_loss.1} parent=0 // loop_header
    %s11 = sphi 0, %s15
    %p12 = scmp.ge.s32.totalorder %s11, 4
    %s19 = sphi 0, %s19
    %s21 = sphi 0, %s19
    %s22 = sphi 0, %s21
    %s36 = sphi 0, %s22
    %s42 = sphi 0, %s44
    %s45 = sphi 0, %s42
    %s46 = sphi 0, %s45
    %s62 = sphi 0, %s46
    %s68 = sphi 0, %s70
    %s71 = sphi 0, %s68
    %s72 = sphi 0, %s71
    %s88 = sphi 0, %s72
    %s94 = sphi 0, %s96
    %s97 = sphi 0, %s94
    %s98 = sphi 0, %s97
    %s114 = sphi 0, %s98
    %s120 = sphi 0, %s122
    %s123 = sphi 0, %s120
    %s124 = sphi 0, %s123
    %s140 = sphi 0, %s124
    %s146 = sphi 0, %s148
    %s149 = sphi 0, %s146
    %s150 = sphi 0, %s149
    %s166 = sphi 0, %s150
  $region4: #{hausdorff_dt_loss.1} parent=0 // loop_header_branch
    %14 = sbr.rel (%p12) target = $region8
  $region5: #{hausdorff_dt_loss.1} parent=0 // loop_body
    %s16 = ssub.s32 %s11, 1
    %s17 = ssub.s32 %s11, 2
    %s18 = sadd.s32 %s11, 1
    %s20 = sadd.s32 %s19, 1
    %p23 = scmp.eq.s32.totalorder %s11, 1
    %p24 = scmp.ne.s32.totalorder %s19, %s21
    %p25 = scmp.eq.s32.totalorder %s11, 0
    %p26 = por %p24, %p25
    %p27 = scmp.ne.s32.totalorder %s19, %s21
    %p28 = scmp.eq.s32.totalorder %s16, 1
    %p29 = por %p27, %p28
    %p30 = scmp.ne.s32.totalorder %s21, %s22
    %p31 = scmp.eq.s32.totalorder %s16, 0
    %p32 = por %p30, %p31
    %p33 = scmp.ne.s32.totalorder %s21, %s22
    %p34 = scmp.eq.s32.totalorder %s17, 1
    %p35 = por %p33, %p34
    %p37 = scmp.ne.s32.totalorder %s22, %s36
    %p38 = scmp.eq.s32.totalorder %s17, 0
    %p39 = por %p37, %p38
    %s40 = ssub.s32 %s11, %s18
    %p41 = scmp.eq.s32.totalorder %s40, 0
    %s43 = sadd.s32 %s42, 1
    %s44 = scalar_select %p41, %s42, %s43
    %p47 = pneg %p41
    %p48 = scmp.eq.s32.totalorder %s11, 1
    %p49 = por %p47, %p48
    %p50 = scmp.ne.s32.totalorder %s42, %s45
    %p51 = scmp.eq.s32.totalorder %s11, 0
    %p52 = por %p50, %p51
    %p53 = scmp.ne.s32.totalorder %s42, %s45
    %p54 = scmp.eq.s32.totalorder %s16, 1
    %p55 = por %p53, %p54
    %p56 = scmp.ne.s32.totalorder %s45, %s46
    %p57 = scmp.eq.s32.totalorder %s16, 0
    %p58 = por %p56, %p57
    %p59 = scmp.ne.s32.totalorder %s45, %s46
    %p60 = scmp.eq.s32.totalorder %s17, 1
    %p61 = por %p59, %p60
    %p63 = scmp.ne.s32.totalorder %s46, %s62
    %p64 = scmp.eq.s32.totalorder %s17, 0
    %p65 = por %p63, %p64
    %s66 = ssub.s32 %s11, %s18
    %p67 = scmp.eq.s32.totalorder %s66, 0
    %s69 = sadd.s32 %s68, 1
    %s70 = scalar_select %p67, %s68, %s69
    %p73 = pneg %p67
    %p74 = scmp.eq.s32.totalorder %s11, 1
    %p75 = por %p73, %p74
    %p76 = scmp.ne.s32.totalorder %s68, %s71
    %p77 = scmp.eq.s32.totalorder %s11, 0
    %p78 = por %p76, %p77
    %p79 = scmp.ne.s32.totalorder %s68, %s71
    %p80 = scmp.eq.s32.totalorder %s16, 1
    %p81 = por %p79, %p80
    %p82 = scmp.ne.s32.totalorder %s71, %s72
    %p83 = scmp.eq.s32.totalorder %s16, 0
    %p84 = por %p82, %p83
    %p85 = scmp.ne.s32.totalorder %s71, %s72
    %p86 = scmp.eq.s32.totalorder %s17, 1
    %p87 = por %p85, %p86
    %p89 = scmp.ne.s32.totalorder %s72, %s88
    %p90 = scmp.eq.s32.totalorder %s17, 0
    %p91 = por %p89, %p90
    %s92 = ssub.s32 %s11, %s18
    %p93 = scmp.eq.s32.totalorder %s92, 0
    %s95 = sadd.s32 %s94, 1
    %s96 = scalar_select %p93, %s94, %s95
    %p99 = pneg %p93
    %p100 = scmp.eq.s32.totalorder %s11, 1
    %p101 = por %p99, %p100
    %p102 = scmp.ne.s32.totalorder %s94, %s97
    %p103 = scmp.eq.s32.totalorder %s11, 0
    %p104 = por %p102, %p103
    %p105 = scmp.ne.s32.totalorder %s94, %s97
    %p106 = scmp.eq.s32.totalorder %s16, 1
    %p107 = por %p105, %p106
    %p108 = scmp.ne.s32.totalorder %s97, %s98
    %p109 = scmp.eq.s32.totalorder %s16, 0
    %p110 = por %p108, %p109
    %p111 = scmp.ne.s32.totalorder %s97, %s98
    %p112 = scmp.eq.s32.totalorder %s17, 1
    %p113 = por %p111, %p112
    %p115 = scmp.ne.s32.totalorder %s98, %s114
    %p116 = scmp.eq.s32.totalorder %s17, 0
    %p117 = por %p115, %p116
    %s118 = ssub.s32 %s11, %s18
    %p119 = scmp.eq.s32.totalorder %s118, 0
    %s121 = sadd.s32 %s120, 1
    %s122 = scalar_select %p119, %s120, %s121
    %p125 = pneg %p119
    %p126 = scmp.eq.s32.totalorder %s11, 1
    %p127 = por %p125, %p126
    %p128 = scmp.ne.s32.totalorder %s120, %s123
    %p129 = scmp.eq.s32.totalorder %s11, 0
    %p130 = por %p128, %p129
    %p131 = scmp.ne.s32.totalorder %s120, %s123
    %p132 = scmp.eq.s32.totalorder %s16, 1
    %p133 = por %p131, %p132
    %p134 = scmp.ne.s32.totalorder %s123, %s124
    %p135 = scmp.eq.s32.totalorder %s16, 0
    %p136 = por %p134, %p135
    %p137 = scmp.ne.s32.totalorder %s123, %s124
    %p138 = scmp.eq.s32.totalorder %s17, 1
    %p139 = por %p137, %p138
    %p141 = scmp.ne.s32.totalorder %s124, %s140
    %p142 = scmp.eq.s32.totalorder %s17, 0
    %p143 = por %p141, %p142
    %s144 = ssub.s32 %s11, %s18
    %p145 = scmp.eq.s32.totalorder %s144, 0
    %s147 = sadd.s32 %s146, 1
    %s148 = scalar_select %p145, %s146, %s147
    %p151 = pneg %p145
    %p152 = scmp.eq.s32.totalorder %s11, 1
    %p153 = por %p151, %p152
    %p154 = scmp.ne.s32.totalorder %s146, %s149
    %p155 = scmp.eq.s32.totalorder %s11, 0
    %p156 = por %p154, %p155
    %p157 = scmp.ne.s32.totalorder %s146, %s149
    %p158 = scmp.eq.s32.totalorder %s16, 1
    %p159 = por %p157, %p158
    %p160 = scmp.ne.s32.totalorder %s149, %s150
    %p161 = scmp.eq.s32.totalorder %s16, 0
    %p162 = por %p160, %p161
    %p163 = scmp.ne.s32.totalorder %s149, %s150
    %p164 = scmp.eq.s32.totalorder %s17, 1
    %p165 = por %p163, %p164
    %p167 = scmp.ne.s32.totalorder %s150, %s166
    %p168 = scmp.eq.s32.totalorder %s17, 0
    %p169 = por %p167, %p168
    %p170 = scmp.le.s32.totalorder 1, %s11
    %p171 = scmp.lt.s32.totalorder %s11, 3
    %p172 = pnand %p170, %p171
    %p173 = pneg %p172
    // Predicated region
    $region9: #{hausdorff_dt_loss.1} parent=5 // pred_check
      _
    $region10: #{hausdorff_dt_loss.1} parent=5 // pred_check_branch
      %175 = sbr.rel (%p172) target = $region12
    $region11: #{hausdorff_dt_loss.1} parent=5 // pred_region
      %s176 = ssub.s32 %s11, 1
      // Predicated region
      $region13: #{hausdorff_dt_loss.1} parent=11 // pred_check
        %p177 = pneg %p32
      $region14: #{hausdorff_dt_loss.1} parent=11 // pred_check_branch
        %179 = sbr.rel (%p177) target = $region16
      $region15: #{hausdorff_dt_loss.1} parent=11 // pred_region
        _
      $region16: #{hausdorff_dt_loss.1} parent=11 // pred_fallthru
        _
    $region12: #{hausdorff_dt_loss.1} parent=5 // pred_fallthru
      _
    %p180 = scmp.lt.s32.totalorder %s11, 2
    // Predicated region
    $region17: #{hausdorff_dt_loss.1} parent=5 // pred_check
      %p181 = pneg %p180
    $region18: #{hausdorff_dt_loss.1} parent=5 // pred_check_branch
      %183 = sbr.rel (%p181) target = $region20
    $region19: #{hausdorff_dt_loss.1} parent=5 // pred_region
      // Predicated region
      $region21: #{hausdorff_dt_loss.1} parent=19 // pred_check
        %p184 = pneg %p52
      $region22: #{hausdorff_dt_loss.1} parent=19 // pred_check_branch
        %186 = sbr.rel (%p184) target = $region24
      $region23: #{hausdorff_dt_loss.1} parent=19 // pred_region
        %p187 = scmp.lt.s32.totalorder %s11, 1
        %s188 = scalar_select %p187, %s11, 1
        %s189 = smul.addr %s188, 2
        %s190 = scalar_lea.vmem %s1, %s189
      $region24: #{hausdorff_dt_loss.1} parent=19 // pred_fallthru
        _
      // Predicated region
      $region25: #{hausdorff_dt_loss.1} parent=19 // pred_check
        %p191 = pneg %p78
      $region26: #{hausdorff_dt_loss.1} parent=19 // pred_check_branch
        %193 = sbr.rel (%p191) target = $region28
      $region27: #{hausdorff_dt_loss.1} parent=19 // pred_region
        %p194 = scmp.lt.s32.totalorder %s11, 1
        %s195 = scalar_select %p194, %s11, 1
        %s196 = smul.addr %s195, 2
        %s197 = scalar_lea.vmem %s2, %s196
      $region28: #{hausdorff_dt_loss.1} parent=19 // pred_fallthru
        _
      // Predicated region
      $region29: #{hausdorff_dt_loss.1} parent=19 // pred_check
        %p198 = pneg %p104
      $region30: #{hausdorff_dt_loss.1} parent=19 // pred_check_branch
        %200 = sbr.rel (%p198) target = $region32
      $region31: #{hausdorff_dt_loss.1} parent=19 // pred_region
        %p201 = scmp.lt.s32.totalorder %s11, 1
        %s202 = scalar_select %p201, %s11, 1
        %s203 = smul.addr %s202, 32
        %s204 = smul.addr %s203, 8
        %s205 = scalar_lea.vmem %s3, %s204
      $region32: #{hausdorff_dt_loss.1} parent=19 // pred_fallthru
        _
      // Predicated region
      $region33: #{hausdorff_dt_loss.1} parent=19 // pred_check
        %p206 = pneg %p130
      $region34: #{hausdorff_dt_loss.1} parent=19 // pred_check_branch
        %208 = sbr.rel (%p206) target = $region36
      $region35: #{hausdorff_dt_loss.1} parent=19 // pred_region
        %p209 = scmp.lt.s32.totalorder %s11, 1
        %s210 = scalar_select %p209, %s11, 1
        %s211 = smul.addr %s210, 32
        %s212 = smul.addr %s211, 8
        %s213 = scalar_lea.vmem %s4, %s212
      $region36: #{hausdorff_dt_loss.1} parent=19 // pred_fallthru
        _
    $region20: #{hausdorff_dt_loss.1} parent=5 // pred_fallthru
      _
    %p214 = scmp.le.s32.totalorder 1, %s11
    %p215 = scmp.lt.s32.totalorder %s11, 3
    %p216 = pnand %p214, %p215
    %p217 = pneg %p216
    // Predicated region
    $region37: #{hausdorff_dt_loss.1} parent=5 // pred_check
      _
    $region38: #{hausdorff_dt_loss.1} parent=5 // pred_check_branch
      %219 = sbr.rel (%p216) target = $region40
    $region39: #{hausdorff_dt_loss.1} parent=5 // pred_region
      %s220 = ssub.s32 %s11, 1
      %p221 = pneg %p32
      %p222 = pneg %p29
      %p223 = scmp.lt.s32.totalorder %s16, 1
      %s224 = scalar_select %p223, %s16, 1
      %s225 = smul.addr %s224, 2
      %s226 = scalar_lea.vmem %s1, %s225
      %p227 = pneg %p58
      %p228 = pneg %p55
      %p229 = scmp.lt.s32.totalorder %s16, 1
      %s230 = scalar_select %p229, %s16, 1
      %s231 = smul.addr %s230, 2
      %s232 = scalar_lea.vmem %s2, %s231
      %p233 = pneg %p84
      %p234 = pneg %p81
      %p235 = scmp.lt.s32.totalorder %s16, 1
      %s236 = scalar_select %p235, %s16, 1
      %s237 = smul.addr %s236, 32
      %s238 = smul.addr %s237, 8
      %s239 = scalar_lea.vmem %s3, %s238
      %p240 = pneg %p110
      %p241 = pneg %p107
      %p242 = scmp.lt.s32.totalorder %s16, 1
      %s243 = scalar_select %p242, %s16, 1
      %s244 = smul.addr %s243, 32
      %s245 = smul.addr %s244, 8
      %s246 = scalar_lea.vmem %s4, %s245
      %p247 = pneg %p136
      %p248 = pneg %p133
      %p249 = pneg %p162
      %p250 = pneg %p159
      %p251 = scmp.lt.s32.totalorder %s16, 1
      %s252 = scalar_select %p251, %s16, 1
      %s253 = scalar_lea.vmem %s5, %s252
      %p254 = scmp.lt.s32.totalorder %s16, 1
      %s255 = scalar_select %p254, %s16, 1
      %s256 = smul.addr %s255, 2
      %s257 = scalar_lea.vmem %s1, %s256
      %p258 = scmp.lt.s32.totalorder %s16, 1
      %s259 = scalar_select %p258, %s16, 1
      %s260 = smul.addr %s259, 2
      %s261 = scalar_lea.vmem %s2, %s260
      %p262 = scmp.lt.s32.totalorder %s16, 1
      %s263 = scalar_select %p262, %s16, 1
      %s264 = smul.addr %s263, 32
      %s265 = smul.addr %s264, 8
      %s266 = scalar_lea.vmem %s3, %s265
      %p267 = scmp.lt.s32.totalorder %s16, 1
      %s268 = scalar_select %p267, %s16, 1
      %s269 = smul.addr %s268, 32
      %s270 = smul.addr %s269, 8
      %s271 = scalar_lea.vmem %s4, %s270
      %p272 = scmp.lt.s32.totalorder %s16, 1
      %s273 = scalar_select %p272, %s16, 1
      %s274 = scalar_lea.vmem %s5, %s273
      %v275 = vld [vmem:[%s0] sm:$0xff]
      %v276 = vld [vmem:[%s0 + $0x8] sm:$0xff]
      %v277 = vld [vmem:[%s0 + $0x10] sm:$0xff]
      %v278 = vld [vmem:[%s0 + $0x18] sm:$0xff]
      %v279 = vld [vmem:[%s0 + $0x20] sm:$0xff]
      %v280 = vld [vmem:[%s0 + $0x28] sm:$0xff]
      %v281 = vld [vmem:[%s0 + $0x30] sm:$0xff]
      %v282 = vld [vmem:[%s0 + $0x38] sm:$0xff]
      %v283 = vld [vmem:[%s0 + $0x40] sm:$0xff]
      %v284 = vld [vmem:[%s0 + $0x48] sm:$0xff]
      %v285 = vld [vmem:[%s0 + $0x50] sm:$0xff]
      %v286 = vld [vmem:[%s0 + $0x58] sm:$0xff]
      %v287 = vld [vmem:[%s0 + $0x60] sm:$0xff]
      %v288 = vld [vmem:[%s0 + $0x68] sm:$0xff]
      %v289 = vld [vmem:[%s0 + $0x70] sm:$0xff]
      %v290 = vld [vmem:[%s0 + $0x78] sm:$0xff]
      %v291 = vld [vmem:[%s0 + $0x80] sm:$0xff]
      %v292 = vld [vmem:[%s0 + $0x88] sm:$0xff]
      %v293 = vld [vmem:[%s0 + $0x90] sm:$0xff]
      %v294 = vld [vmem:[%s0 + $0x98] sm:$0xff]
      %v295 = vld [vmem:[%s0 + $0xa0] sm:$0xff]
      %v296 = vld [vmem:[%s0 + $0xa8] sm:$0xff]
      %v297 = vld [vmem:[%s0 + $0xb0] sm:$0xff]
      %v298 = vld [vmem:[%s0 + $0xb8] sm:$0xff]
      %v299 = vld [vmem:[%s0 + $0xc0] sm:$0xff]
      %v300 = vld [vmem:[%s0 + $0xc8] sm:$0xff]
      %v301 = vld [vmem:[%s0 + $0xd0] sm:$0xff]
      %v302 = vld [vmem:[%s0 + $0xd8] sm:$0xff]
      %v303 = vld [vmem:[%s0 + $0xe0] sm:$0xff]
      %v304 = vld [vmem:[%s0 + $0xe8] sm:$0xff]
      %v305 = vld [vmem:[%s0 + $0xf0] sm:$0xff]
      %v306 = vld [vmem:[%s0 + $0xf8] sm:$0xff]
      %v307 = vld [vmem:[%s0 + $0x100] sm:$0xff]
      %v308 = vld [vmem:[%s0 + $0x108] sm:$0xff]
      %v309 = vld [vmem:[%s0 + $0x110] sm:$0xff]
      %v310 = vld [vmem:[%s0 + $0x118] sm:$0xff]
      %v311 = vld [vmem:[%s0 + $0x120] sm:$0xff]
      %v312 = vld [vmem:[%s0 + $0x128] sm:$0xff]
      %v313 = vld [vmem:[%s0 + $0x130] sm:$0xff]
      %v314 = vld [vmem:[%s0 + $0x138] sm:$0xff]
      %v315 = vld [vmem:[%s0 + $0x140] sm:$0xff]
      %v316 = vld [vmem:[%s0 + $0x148] sm:$0xff]
      %v317 = vld [vmem:[%s0 + $0x150] sm:$0xff]
      %v318 = vld [vmem:[%s0 + $0x158] sm:$0xff]
      %v319 = vld [vmem:[%s0 + $0x160] sm:$0xff]
      %v320 = vld [vmem:[%s0 + $0x168] sm:$0xff]
      %v321 = vld [vmem:[%s0 + $0x170] sm:$0xff]
      %v322 = vld [vmem:[%s0 + $0x178] sm:$0xff]
      %v323 = vld [vmem:[%s0 + $0x180] sm:$0xff]
      %v324 = vld [vmem:[%s0 + $0x188] sm:$0xff]
      %v325 = vld [vmem:[%s0 + $0x190] sm:$0xff]
      %v326 = vld [vmem:[%s0 + $0x198] sm:$0xff]
      %v327 = vld [vmem:[%s0 + $0x1a0] sm:$0xff]
      %v328 = vld [vmem:[%s0 + $0x1a8] sm:$0xff]
      %v329 = vld [vmem:[%s0 + $0x1b0] sm:$0xff]
      %v330 = vld [vmem:[%s0 + $0x1b8] sm:$0xff]
      %v331 = vld [vmem:[%s0 + $0x1c0] sm:$0xff]
      %v332 = vld [vmem:[%s0 + $0x1c8] sm:$0xff]
      %v333 = vld [vmem:[%s0 + $0x1d0] sm:$0xff]
      %v334 = vld [vmem:[%s0 + $0x1d8] sm:$0xff]
      %v335 = vld [vmem:[%s0 + $0x1e0] sm:$0xff]
      %v336 = vld [vmem:[%s0 + $0x1e8] sm:$0xff]
      %v337 = vld [vmem:[%s0 + $0x1f0] sm:$0xff]
      %v338 = vld [vmem:[%s0 + $0x1f8] sm:$0xff]
      %v339 = vld [vmem:[%s257] sm:$0x3]
      %v340 = vld [vmem:[%s261] sm:$0x3]
      %v341 = vld [vmem:[%s266] sm:$0xff]
      %v342 = vld [vmem:[%s266 + $0x8] sm:$0xff]
      %v343 = vld [vmem:[%s266 + $0x10] sm:$0xff]
      %v344 = vld [vmem:[%s266 + $0x18] sm:$0xff]
      %v345 = vld [vmem:[%s266 + $0x20] sm:$0xff]
      %v346 = vld [vmem:[%s266 + $0x28] sm:$0xff]
      %v347 = vld [vmem:[%s266 + $0x30] sm:$0xff]
      %v348 = vld [vmem:[%s266 + $0x38] sm:$0xff]
      %v349 = vld [vmem:[%s266 + $0x40] sm:$0xff]
      %v350 = vld [vmem:[%s266 + $0x48] sm:$0xff]
      %v351 = vld [vmem:[%s266 + $0x50] sm:$0xff]
      %v352 = vld [vmem:[%s266 + $0x58] sm:$0xff]
      %v353 = vld [vmem:[%s266 + $0x60] sm:$0xff]
      %v354 = vld [vmem:[%s266 + $0x68] sm:$0xff]
      %v355 = vld [vmem:[%s266 + $0x70] sm:$0xff]
      %v356 = vld [vmem:[%s266 + $0x78] sm:$0xff]
      %v357 = vld [vmem:[%s266 + $0x80] sm:$0xff]
      %v358 = vld [vmem:[%s266 + $0x88] sm:$0xff]
      %v359 = vld [vmem:[%s266 + $0x90] sm:$0xff]
      %v360 = vld [vmem:[%s266 + $0x98] sm:$0xff]
      %v361 = vld [vmem:[%s266 + $0xa0] sm:$0xff]
      %v362 = vld [vmem:[%s266 + $0xa8] sm:$0xff]
      %v363 = vld [vmem:[%s266 + $0xb0] sm:$0xff]
      %v364 = vld [vmem:[%s266 + $0xb8] sm:$0xff]
      %v365 = vld [vmem:[%s266 + $0xc0] sm:$0xff]
      %v366 = vld [vmem:[%s266 + $0xc8] sm:$0xff]
      %v367 = vld [vmem:[%s266 + $0xd0] sm:$0xff]
      %v368 = vld [vmem:[%s266 + $0xd8] sm:$0xff]
      %v369 = vld [vmem:[%s266 + $0xe0] sm:$0xff]
      %v370 = vld [vmem:[%s266 + $0xe8] sm:$0xff]
      %v371 = vld [vmem:[%s266 + $0xf0] sm:$0xff]
      %v372 = vld [vmem:[%s266 + $0xf8] sm:$0xff]
      %vm373 = vcmp.gt.f32.partialorder %v339, 0.5
      %v374 = vsel %vm373, 1, 0
      %v375 = vcvt.s32.f32 %v374
      %377 = vset.pattern.permute.xlu0 0
      %378 = vperm.xlu0 %377, %v341
      %v379 = vpop.permute.xlu0 %378
      %382 = vset.pattern.permute.xlu0 0
      %383 = vperm.xlu0 %382, %v342
      %v384 = vpop.permute.xlu0 %383
      %387 = vset.pattern.permute.xlu0 0
      %388 = vperm.xlu0 %387, %v343
      %v389 = vpop.permute.xlu0 %388
      %392 = vset.pattern.permute.xlu0 0
      %393 = vperm.xlu0 %392, %v344
      %v394 = vpop.permute.xlu0 %393
      %397 = vset.pattern.permute.xlu0 0
      %398 = vperm.xlu0 %397, %v345
      %v399 = vpop.permute.xlu0 %398
      %402 = vset.pattern.permute.xlu0 0
      %403 = vperm.xlu0 %402, %v346
      %v404 = vpop.permute.xlu0 %403
      %407 = vset.pattern.permute.xlu0 0
      %408 = vperm.xlu0 %407, %v347
      %v409 = vpop.permute.xlu0 %408
      %412 = vset.pattern.permute.xlu0 0
      %413 = vperm.xlu0 %412, %v348
      %v414 = vpop.permute.xlu0 %413
      %417 = vset.pattern.permute.xlu0 0
      %418 = vperm.xlu0 %417, %v349
      %v419 = vpop.permute.xlu0 %418
      %422 = vset.pattern.permute.xlu0 0
      %423 = vperm.xlu0 %422, %v350
      %v424 = vpop.permute.xlu0 %423
      %427 = vset.pattern.permute.xlu0 0
      %428 = vperm.xlu0 %427, %v351
      %v429 = vpop.permute.xlu0 %428
      %432 = vset.pattern.permute.xlu0 0
      %433 = vperm.xlu0 %432, %v352
      %v434 = vpop.permute.xlu0 %433
      %437 = vset.pattern.permute.xlu0 0
      %438 = vperm.xlu0 %437, %v353
      %v439 = vpop.permute.xlu0 %438
      %442 = vset.pattern.permute.xlu0 0
      %443 = vperm.xlu0 %442, %v354
      %v444 = vpop.permute.xlu0 %443
      %447 = vset.pattern.permute.xlu0 0
      %448 = vperm.xlu0 %447, %v355
      %v449 = vpop.permute.xlu0 %448
      %452 = vset.pattern.permute.xlu0 0
      %453 = vperm.xlu0 %452, %v356
      %v454 = vpop.permute.xlu0 %453
      %457 = vset.pattern.permute.xlu0 0
      %458 = vperm.xlu0 %457, %v357
      %v459 = vpop.permute.xlu0 %458
      %462 = vset.pattern.permute.xlu0 0
      %463 = vperm.xlu0 %462, %v358
      %v464 = vpop.permute.xlu0 %463
      %467 = vset.pattern.permute.xlu0 0
      %468 = vperm.xlu0 %467, %v359
      %v469 = vpop.permute.xlu0 %468
      %472 = vset.pattern.permute.xlu0 0
      %473 = vperm.xlu0 %472, %v360
      %v474 = vpop.permute.xlu0 %473
      %477 = vset.pattern.permute.xlu0 0
      %478 = vperm.xlu0 %477, %v361
      %v479 = vpop.permute.xlu0 %478
      %482 = vset.pattern.permute.xlu0 0
      %483 = vperm.xlu0 %482, %v362
      %v484 = vpop.permute.xlu0 %483
      %487 = vset.pattern.permute.xlu0 0
      %488 = vperm.xlu0 %487, %v363
      %v489 = vpop.permute.xlu0 %488
      %492 = vset.pattern.permute.xlu0 0
      %493 = vperm.xlu0 %492, %v364
      %v494 = vpop.permute.xlu0 %493
      %497 = vset.pattern.permute.xlu0 0
      %498 = vperm.xlu0 %497, %v365
      %v499 = vpop.permute.xlu0 %498
      %502 = vset.pattern.permute.xlu0 0
      %503 = vperm.xlu0 %502, %v366
      %v504 = vpop.permute.xlu0 %503
      %507 = vset.pattern.permute.xlu0 0
      %508 = vperm.xlu0 %507, %v367
      %v509 = vpop.permute.xlu0 %508
      %512 = vset.pattern.permute.xlu0 0
      %513 = vperm.xlu0 %512, %v368
      %v514 = vpop.permute.xlu0 %513
      %517 = vset.pattern.permute.xlu0 0
      %518 = vperm.xlu0 %517, %v369
      %v519 = vpop.permute.xlu0 %518
      %522 = vset.pattern.permute.xlu0 0
      %523 = vperm.xlu0 %522, %v370
      %v524 = vpop.permute.xlu0 %523
      %527 = vset.pattern.permute.xlu0 0
      %528 = vperm.xlu0 %527, %v371
      %v529 = vpop.permute.xlu0 %528
      %532 = vset.pattern.permute.xlu0 0
      %533 = vperm.xlu0 %532, %v372
      %v534 = vpop.permute.xlu0 %533
      %v537 = vperm.slane %v375, 0
      %v538 = vperm.slane %v375, 1
      %vm541 = vcmp.ne.f32.partialorder %v379, %v537
      %vm542 = vcmp.ne.f32.partialorder %v379, %v538
      %vm543 = vcmp.ne.f32.partialorder %v384, %v537
      %vm544 = vcmp.ne.f32.partialorder %v384, %v538
      %vm545 = vcmp.ne.f32.partialorder %v389, %v537
      %vm546 = vcmp.ne.f32.partialorder %v389, %v538
      %vm547 = vcmp.ne.f32.partialorder %v394, %v537
      %vm548 = vcmp.ne.f32.partialorder %v394, %v538
      %vm549 = vcmp.ne.f32.partialorder %v399, %v537
      %vm550 = vcmp.ne.f32.partialorder %v399, %v538
      %vm551 = vcmp.ne.f32.partialorder %v404, %v537
      %vm552 = vcmp.ne.f32.partialorder %v404, %v538
      %vm553 = vcmp.ne.f32.partialorder %v409, %v537
      %vm554 = vcmp.ne.f32.partialorder %v409, %v538
      %vm555 = vcmp.ne.f32.partialorder %v414, %v537
      %vm556 = vcmp.ne.f32.partialorder %v414, %v538
      %vm557 = vcmp.ne.f32.partialorder %v419, %v537
      %vm558 = vcmp.ne.f32.partialorder %v419, %v538
      %vm559 = vcmp.ne.f32.partialorder %v424, %v537
      %vm560 = vcmp.ne.f32.partialorder %v424, %v538
      %vm561 = vcmp.ne.f32.partialorder %v429, %v537
      %vm562 = vcmp.ne.f32.partialorder %v429, %v538
      %vm563 = vcmp.ne.f32.partialorder %v434, %v537
      %vm564 = vcmp.ne.f32.partialorder %v434, %v538
      %vm565 = vcmp.ne.f32.partialorder %v439, %v537
      %vm566 = vcmp.ne.f32.partialorder %v439, %v538
      %vm567 = vcmp.ne.f32.partialorder %v444, %v537
      %vm568 = vcmp.ne.f32.partialorder %v444, %v538
      %vm569 = vcmp.ne.f32.partialorder %v449, %v537
      %vm570 = vcmp.ne.f32.partialorder %v449, %v538
      %vm571 = vcmp.ne.f32.partialorder %v454, %v537
      %vm572 = vcmp.ne.f32.partialorder %v454, %v538
      %vm573 = vcmp.ne.f32.partialorder %v459, %v537
      %vm574 = vcmp.ne.f32.partialorder %v459, %v538
      %vm575 = vcmp.ne.f32.partialorder %v464, %v537
      %vm576 = vcmp.ne.f32.partialorder %v464, %v538
      %vm577 = vcmp.ne.f32.partialorder %v469, %v537
      %vm578 = vcmp.ne.f32.partialorder %v469, %v538
      %vm579 = vcmp.ne.f32.partialorder %v474, %v537
      %vm580 = vcmp.ne.f32.partialorder %v474, %v538
      %vm581 = vcmp.ne.f32.partialorder %v479, %v537
      %vm582 = vcmp.ne.f32.partialorder %v479, %v538
      %vm583 = vcmp.ne.f32.partialorder %v484, %v537
      %vm584 = vcmp.ne.f32.partialorder %v484, %v538
      %vm585 = vcmp.ne.f32.partialorder %v489, %v537
      %vm586 = vcmp.ne.f32.partialorder %v489, %v538
      %vm587 = vcmp.ne.f32.partialorder %v494, %v537
      %vm588 = vcmp.ne.f32.partialorder %v494, %v538
      %vm589 = vcmp.ne.f32.partialorder %v499, %v537
      %vm590 = vcmp.ne.f32.partialorder %v499, %v538
      %vm591 = vcmp.ne.f32.partialorder %v504, %v537
      %vm592 = vcmp.ne.f32.partialorder %v504, %v538
      %vm593 = vcmp.ne.f32.partialorder %v509, %v537
      %vm594 = vcmp.ne.f32.partialorder %v509, %v538
      %vm595 = vcmp.ne.f32.partialorder %v514, %v537
      %vm596 = vcmp.ne.f32.partialorder %v514, %v538
      %vm597 = vcmp.ne.f32.partialorder %v519, %v537
      %vm598 = vcmp.ne.f32.partialorder %v519, %v538
      %vm599 = vcmp.ne.f32.partialorder %v524, %v537
      %vm600 = vcmp.ne.f32.partialorder %v524, %v538
      %vm601 = vcmp.ne.f32.partialorder %v529, %v537
      %vm602 = vcmp.ne.f32.partialorder %v529, %v538
      %vm603 = vcmp.ne.f32.partialorder %v534, %v537
      %vm604 = vcmp.ne.f32.partialorder %v534, %v538
      %v605 = vsel %vm541, %v275, 1e+09
      %v606 = vsel %vm542, %v276, 1e+09
      %v607 = vsel %vm543, %v277, 1e+09
      %v608 = vsel %vm544, %v278, 1e+09
      %v609 = vsel %vm545, %v279, 1e+09
      %v610 = vsel %vm546, %v280, 1e+09
      %v611 = vsel %vm547, %v281, 1e+09
      %v612 = vsel %vm548, %v282, 1e+09
      %v613 = vsel %vm549, %v283, 1e+09
      %v614 = vsel %vm550, %v284, 1e+09
      %v615 = vsel %vm551, %v285, 1e+09
      %v616 = vsel %vm552, %v286, 1e+09
      %v617 = vsel %vm553, %v287, 1e+09
      %v618 = vsel %vm554, %v288, 1e+09
      %v619 = vsel %vm555, %v289, 1e+09
      %v620 = vsel %vm556, %v290, 1e+09
      %v621 = vsel %vm557, %v291, 1e+09
      %v622 = vsel %vm558, %v292, 1e+09
      %v623 = vsel %vm559, %v293, 1e+09
      %v624 = vsel %vm560, %v294, 1e+09
      %v625 = vsel %vm561, %v295, 1e+09
      %v626 = vsel %vm562, %v296, 1e+09
      %v627 = vsel %vm563, %v297, 1e+09
      %v628 = vsel %vm564, %v298, 1e+09
      %v629 = vsel %vm565, %v299, 1e+09
      %v630 = vsel %vm566, %v300, 1e+09
      %v631 = vsel %vm567, %v301, 1e+09
      %v632 = vsel %vm568, %v302, 1e+09
      %v633 = vsel %vm569, %v303, 1e+09
      %v634 = vsel %vm570, %v304, 1e+09
      %v635 = vsel %vm571, %v305, 1e+09
      %v636 = vsel %vm572, %v306, 1e+09
      %v637 = vsel %vm573, %v307, 1e+09
      %v638 = vsel %vm574, %v308, 1e+09
      %v639 = vsel %vm575, %v309, 1e+09
      %v640 = vsel %vm576, %v310, 1e+09
      %v641 = vsel %vm577, %v311, 1e+09
      %v642 = vsel %vm578, %v312, 1e+09
      %v643 = vsel %vm579, %v313, 1e+09
      %v644 = vsel %vm580, %v314, 1e+09
      %v645 = vsel %vm581, %v315, 1e+09
      %v646 = vsel %vm582, %v316, 1e+09
      %v647 = vsel %vm583, %v317, 1e+09
      %v648 = vsel %vm584, %v318, 1e+09
      %v649 = vsel %vm585, %v319, 1e+09
      %v650 = vsel %vm586, %v320, 1e+09
      %v651 = vsel %vm587, %v321, 1e+09
      %v652 = vsel %vm588, %v322, 1e+09
      %v653 = vsel %vm589, %v323, 1e+09
      %v654 = vsel %vm590, %v324, 1e+09
      %v655 = vsel %vm591, %v325, 1e+09
      %v656 = vsel %vm592, %v326, 1e+09
      %v657 = vsel %vm593, %v327, 1e+09
      %v658 = vsel %vm594, %v328, 1e+09
      %v659 = vsel %vm595, %v329, 1e+09
      %v660 = vsel %vm596, %v330, 1e+09
      %v661 = vsel %vm597, %v331, 1e+09
      %v662 = vsel %vm598, %v332, 1e+09
      %v663 = vsel %vm599, %v333, 1e+09
      %v664 = vsel %vm600, %v334, 1e+09
      %v665 = vsel %vm601, %v335, 1e+09
      %v666 = vsel %vm602, %v336, 1e+09
      %v667 = vsel %vm603, %v337, 1e+09
      %v668 = vsel %vm604, %v338, 1e+09
      %v669 = vmin.f32 %v605, %v609
      %v670 = vmin.f32 %v607, %v611
      %v671 = vmin.f32 %v669, %v613
      %v672 = vmin.f32 %v670, %v615
      %v673 = vmin.f32 %v671, %v617
      %v674 = vmin.f32 %v672, %v619
      %v675 = vmin.f32 %v673, %v621
      %v676 = vmin.f32 %v674, %v623
      %v677 = vmin.f32 %v675, %v625
      %v678 = vmin.f32 %v676, %v627
      %v679 = vmin.f32 %v677, %v629
      %v680 = vmin.f32 %v678, %v631
      %v681 = vmin.f32 %v679, %v633
      %v682 = vmin.f32 %v680, %v635
      %v683 = vmin.f32 %v681, %v637
      %v684 = vmin.f32 %v682, %v639
      %v685 = vmin.f32 %v683, %v641
      %v686 = vmin.f32 %v684, %v643
      %v687 = vmin.f32 %v685, %v645
      %v688 = vmin.f32 %v686, %v647
      %v689 = vmin.f32 %v687, %v649
      %v690 = vmin.f32 %v688, %v651
      %v691 = vmin.f32 %v689, %v653
      %v692 = vmin.f32 %v690, %v655
      %v693 = vmin.f32 %v691, %v657
      %v694 = vmin.f32 %v692, %v659
      %v695 = vmin.f32 %v693, %v661
      %v696 = vmin.f32 %v694, %v663
      %v697 = vmin.f32 %v695, %v665
      %v698 = vmin.f32 %v696, %v667
      %v699 = vmin.f32 %v697, %v698
      %v700 = vrot.slane %v699, 4
      %v701 = vmin.f32 %v699, %v700
      %v702 = vrot.slane %v701, 2
      %v703 = vmin.f32 %v701, %v702
      %v704 = vrot.slane %v703, 1
      %v705 = vmin.f32 %v703, %v704
      %v706 = vmin.f32 %v606, %v610
      %v707 = vmin.f32 %v608, %v612
      %v708 = vmin.f32 %v706, %v614
      %v709 = vmin.f32 %v707, %v616
      %v710 = vmin.f32 %v708, %v618
      %v711 = vmin.f32 %v709, %v620
      %v712 = vmin.f32 %v710, %v622
      %v713 = vmin.f32 %v711, %v624
      %v714 = vmin.f32 %v712, %v626
      %v715 = vmin.f32 %v713, %v628
      %v716 = vmin.f32 %v714, %v630
      %v717 = vmin.f32 %v715, %v632
      %v718 = vmin.f32 %v716, %v634
      %v719 = vmin.f32 %v717, %v636
      %v720 = vmin.f32 %v718, %v638
      %v721 = vmin.f32 %v719, %v640
      %v722 = vmin.f32 %v720, %v642
      %v723 = vmin.f32 %v721, %v644
      %v724 = vmin.f32 %v722, %v646
      %v725 = vmin.f32 %v723, %v648
      %v726 = vmin.f32 %v724, %v650
      %v727 = vmin.f32 %v725, %v652
      %v728 = vmin.f32 %v726, %v654
      %v729 = vmin.f32 %v727, %v656
      %v730 = vmin.f32 %v728, %v658
      %v731 = vmin.f32 %v729, %v660
      %v732 = vmin.f32 %v730, %v662
      %v733 = vmin.f32 %v731, %v664
      %v734 = vmin.f32 %v732, %v666
      %v735 = vmin.f32 %v733, %v668
      %v736 = vmin.f32 %v734, %v735
      %v737 = vrot.slane %v736, 4
      %v738 = vmin.f32 %v736, %v737
      %v739 = vrot.slane %v738, 2
      %v740 = vmin.f32 %v738, %v739
      %v741 = vrot.slane %v740, 1
      %v742 = vmin.f32 %v740, %v741
      %vm743 = vcmask 1040384
      %v744 = vsel %vm743, %v537, -inf
      %v745 = vsel %vm743, %v538, -inf
      %v746 = vmax.f32 %v744, %v745
      %747 = vmax.xlane.f32.xlu0 %v746
      %v748 = vpop.xlane.xlu0 %747
      %v749 = vmul.f32 %v705, %v748
      %v750 = vmul.f32 %v742, %v748
      %v751 = vld [vmem:[%s271] sm:$0xff]
      %v752 = vld [vmem:[%s271 + $0x8] sm:$0xff]
      %v753 = vld [vmem:[%s271 + $0x10] sm:$0xff]
      %v754 = vld [vmem:[%s271 + $0x18] sm:$0xff]
      %v755 = vld [vmem:[%s271 + $0x20] sm:$0xff]
      %v756 = vld [vmem:[%s271 + $0x28] sm:$0xff]
      %v757 = vld [vmem:[%s271 + $0x30] sm:$0xff]
      %v758 = vld [vmem:[%s271 + $0x38] sm:$0xff]
      %v759 = vld [vmem:[%s271 + $0x40] sm:$0xff]
      %v760 = vld [vmem:[%s271 + $0x48] sm:$0xff]
      %v761 = vld [vmem:[%s271 + $0x50] sm:$0xff]
      %v762 = vld [vmem:[%s271 + $0x58] sm:$0xff]
      %v763 = vld [vmem:[%s271 + $0x60] sm:$0xff]
      %v764 = vld [vmem:[%s271 + $0x68] sm:$0xff]
      %v765 = vld [vmem:[%s271 + $0x70] sm:$0xff]
      %v766 = vld [vmem:[%s271 + $0x78] sm:$0xff]
      %v767 = vld [vmem:[%s271 + $0x80] sm:$0xff]
      %v768 = vld [vmem:[%s271 + $0x88] sm:$0xff]
      %v769 = vld [vmem:[%s271 + $0x90] sm:$0xff]
      %v770 = vld [vmem:[%s271 + $0x98] sm:$0xff]
      %v771 = vld [vmem:[%s271 + $0xa0] sm:$0xff]
      %v772 = vld [vmem:[%s271 + $0xa8] sm:$0xff]
      %v773 = vld [vmem:[%s271 + $0xb0] sm:$0xff]
      %v774 = vld [vmem:[%s271 + $0xb8] sm:$0xff]
      %v775 = vld [vmem:[%s271 + $0xc0] sm:$0xff]
      %v776 = vld [vmem:[%s271 + $0xc8] sm:$0xff]
      %v777 = vld [vmem:[%s271 + $0xd0] sm:$0xff]
      %v778 = vld [vmem:[%s271 + $0xd8] sm:$0xff]
      %v779 = vld [vmem:[%s271 + $0xe0] sm:$0xff]
      %v780 = vld [vmem:[%s271 + $0xe8] sm:$0xff]
      %v781 = vld [vmem:[%s271 + $0xf0] sm:$0xff]
      %v782 = vld [vmem:[%s271 + $0xf8] sm:$0xff]
      %vm783 = vcmp.gt.f32.partialorder %v340, 0.5
      %v784 = vsel %vm783, 1, 0
      %v785 = vcvt.s32.f32 %v784
      %787 = vset.pattern.permute.xlu0 0
      %788 = vperm.xlu0 %787, %v751
      %v789 = vpop.permute.xlu0 %788
      %792 = vset.pattern.permute.xlu0 0
      %793 = vperm.xlu0 %792, %v752
      %v794 = vpop.permute.xlu0 %793
      %797 = vset.pattern.permute.xlu0 0
      %798 = vperm.xlu0 %797, %v753
      %v799 = vpop.permute.xlu0 %798
      %802 = vset.pattern.permute.xlu0 0
      %803 = vperm.xlu0 %802, %v754
      %v804 = vpop.permute.xlu0 %803
      %807 = vset.pattern.permute.xlu0 0
      %808 = vperm.xlu0 %807, %v755
      %v809 = vpop.permute.xlu0 %808
      %812 = vset.pattern.permute.xlu0 0
      %813 = vperm.xlu0 %812, %v756
      %v814 = vpop.permute.xlu0 %813
      %817 = vset.pattern.permute.xlu0 0
      %818 = vperm.xlu0 %817, %v757
      %v819 = vpop.permute.xlu0 %818
      %822 = vset.pattern.permute.xlu0 0
      %823 = vperm.xlu0 %822, %v758
      %v824 = vpop.permute.xlu0 %823
      %827 = vset.pattern.permute.xlu0 0
      %828 = vperm.xlu0 %827, %v759
      %v829 = vpop.permute.xlu0 %828
      %832 = vset.pattern.permute.xlu0 0
      %833 = vperm.xlu0 %832, %v760
      %v834 = vpop.permute.xlu0 %833
      %837 = vset.pattern.permute.xlu0 0
      %838 = vperm.xlu0 %837, %v761
      %v839 = vpop.permute.xlu0 %838
      %842 = vset.pattern.permute.xlu0 0
      %843 = vperm.xlu0 %842, %v762
      %v844 = vpop.permute.xlu0 %843
      %847 = vset.pattern.permute.xlu0 0
      %848 = vperm.xlu0 %847, %v763
      %v849 = vpop.permute.xlu0 %848
      %852 = vset.pattern.permute.xlu0 0
      %853 = vperm.xlu0 %852, %v764
      %v854 = vpop.permute.xlu0 %853
      %857 = vset.pattern.permute.xlu0 0
      %858 = vperm.xlu0 %857, %v765
      %v859 = vpop.permute.xlu0 %858
      %862 = vset.pattern.permute.xlu0 0
      %863 = vperm.xlu0 %862, %v766
      %v864 = vpop.permute.xlu0 %863
      %867 = vset.pattern.permute.xlu0 0
      %868 = vperm.xlu0 %867, %v767
      %v869 = vpop.permute.xlu0 %868
      %872 = vset.pattern.permute.xlu0 0
      %873 = vperm.xlu0 %872, %v768
      %v874 = vpop.permute.xlu0 %873
      %877 = vset.pattern.permute.xlu0 0
      %878 = vperm.xlu0 %877, %v769
      %v879 = vpop.permute.xlu0 %878
      %882 = vset.pattern.permute.xlu0 0
      %883 = vperm.xlu0 %882, %v770
      %v884 = vpop.permute.xlu0 %883
      %887 = vset.pattern.permute.xlu0 0
      %888 = vperm.xlu0 %887, %v771
      %v889 = vpop.permute.xlu0 %888
      %892 = vset.pattern.permute.xlu0 0
      %893 = vperm.xlu0 %892, %v772
      %v894 = vpop.permute.xlu0 %893
      %897 = vset.pattern.permute.xlu0 0
      %898 = vperm.xlu0 %897, %v773
      %v899 = vpop.permute.xlu0 %898
      %902 = vset.pattern.permute.xlu0 0
      %903 = vperm.xlu0 %902, %v774
      %v904 = vpop.permute.xlu0 %903
      %907 = vset.pattern.permute.xlu0 0
      %908 = vperm.xlu0 %907, %v775
      %v909 = vpop.permute.xlu0 %908
      %912 = vset.pattern.permute.xlu0 0
      %913 = vperm.xlu0 %912, %v776
      %v914 = vpop.permute.xlu0 %913
      %917 = vset.pattern.permute.xlu0 0
      %918 = vperm.xlu0 %917, %v777
      %v919 = vpop.permute.xlu0 %918
      %922 = vset.pattern.permute.xlu0 0
      %923 = vperm.xlu0 %922, %v778
      %v924 = vpop.permute.xlu0 %923
      %927 = vset.pattern.permute.xlu0 0
      %928 = vperm.xlu0 %927, %v779
      %v929 = vpop.permute.xlu0 %928
      %932 = vset.pattern.permute.xlu0 0
      %933 = vperm.xlu0 %932, %v780
      %v934 = vpop.permute.xlu0 %933
      %937 = vset.pattern.permute.xlu0 0
      %938 = vperm.xlu0 %937, %v781
      %v939 = vpop.permute.xlu0 %938
      %942 = vset.pattern.permute.xlu0 0
      %943 = vperm.xlu0 %942, %v782
      %v944 = vpop.permute.xlu0 %943
      %v947 = vperm.slane %v785, 0
      %v948 = vperm.slane %v785, 1
      %vm951 = vcmp.ne.f32.partialorder %v789, %v947
      %vm952 = vcmp.ne.f32.partialorder %v789, %v948
      %vm953 = vcmp.ne.f32.partialorder %v794, %v947
      %vm954 = vcmp.ne.f32.partialorder %v794, %v948
      %vm955 = vcmp.ne.f32.partialorder %v799, %v947
      %vm956 = vcmp.ne.f32.partialorder %v799, %v948
      %vm957 = vcmp.ne.f32.partialorder %v804, %v947
      %vm958 = vcmp.ne.f32.partialorder %v804, %v948
      %vm959 = vcmp.ne.f32.partialorder %v809, %v947
      %vm960 = vcmp.ne.f32.partialorder %v809, %v948
      %vm961 = vcmp.ne.f32.partialorder %v814, %v947
      %vm962 = vcmp.ne.f32.partialorder %v814, %v948
      %vm963 = vcmp.ne.f32.partialorder %v819, %v947
      %vm964 = vcmp.ne.f32.partialorder %v819, %v948
      %vm965 = vcmp.ne.f32.partialorder %v824, %v947
      %vm966 = vcmp.ne.f32.partialorder %v824, %v948
      %vm967 = vcmp.ne.f32.partialorder %v829, %v947
      %vm968 = vcmp.ne.f32.partialorder %v829, %v948
      %vm969 = vcmp.ne.f32.partialorder %v834, %v947
      %vm970 = vcmp.ne.f32.partialorder %v834, %v948
      %vm971 = vcmp.ne.f32.partialorder %v839, %v947
      %vm972 = vcmp.ne.f32.partialorder %v839, %v948
      %vm973 = vcmp.ne.f32.partialorder %v844, %v947
      %vm974 = vcmp.ne.f32.partialorder %v844, %v948
      %vm975 = vcmp.ne.f32.partialorder %v849, %v947
      %vm976 = vcmp.ne.f32.partialorder %v849, %v948
      %vm977 = vcmp.ne.f32.partialorder %v854, %v947
      %vm978 = vcmp.ne.f32.partialorder %v854, %v948
      %vm979 = vcmp.ne.f32.partialorder %v859, %v947
      %vm980 = vcmp.ne.f32.partialorder %v859, %v948
      %vm981 = vcmp.ne.f32.partialorder %v864, %v947
      %vm982 = vcmp.ne.f32.partialorder %v864, %v948
      %vm983 = vcmp.ne.f32.partialorder %v869, %v947
      %vm984 = vcmp.ne.f32.partialorder %v869, %v948
      %vm985 = vcmp.ne.f32.partialorder %v874, %v947
      %vm986 = vcmp.ne.f32.partialorder %v874, %v948
      %vm987 = vcmp.ne.f32.partialorder %v879, %v947
      %vm988 = vcmp.ne.f32.partialorder %v879, %v948
      %vm989 = vcmp.ne.f32.partialorder %v884, %v947
      %vm990 = vcmp.ne.f32.partialorder %v884, %v948
      %vm991 = vcmp.ne.f32.partialorder %v889, %v947
      %vm992 = vcmp.ne.f32.partialorder %v889, %v948
      %vm993 = vcmp.ne.f32.partialorder %v894, %v947
      %vm994 = vcmp.ne.f32.partialorder %v894, %v948
      %vm995 = vcmp.ne.f32.partialorder %v899, %v947
      %vm996 = vcmp.ne.f32.partialorder %v899, %v948
      %vm997 = vcmp.ne.f32.partialorder %v904, %v947
      %vm998 = vcmp.ne.f32.partialorder %v904, %v948
      %vm999 = vcmp.ne.f32.partialorder %v909, %v947
      %vm1000 = vcmp.ne.f32.partialorder %v909, %v948
      %vm1001 = vcmp.ne.f32.partialorder %v914, %v947
      %vm1002 = vcmp.ne.f32.partialorder %v914, %v948
      %vm1003 = vcmp.ne.f32.partialorder %v919, %v947
      %vm1004 = vcmp.ne.f32.partialorder %v919, %v948
      %vm1005 = vcmp.ne.f32.partialorder %v924, %v947
      %vm1006 = vcmp.ne.f32.partialorder %v924, %v948
      %vm1007 = vcmp.ne.f32.partialorder %v929, %v947
      %vm1008 = vcmp.ne.f32.partialorder %v929, %v948
      %vm1009 = vcmp.ne.f32.partialorder %v934, %v947
      %vm1010 = vcmp.ne.f32.partialorder %v934, %v948
      %vm1011 = vcmp.ne.f32.partialorder %v939, %v947
      %vm1012 = vcmp.ne.f32.partialorder %v939, %v948
      %vm1013 = vcmp.ne.f32.partialorder %v944, %v947
      %vm1014 = vcmp.ne.f32.partialorder %v944, %v948
      %v1015 = vsel %vm951, %v275, 1e+09
      %v1016 = vsel %vm952, %v276, 1e+09
      %v1017 = vsel %vm953, %v277, 1e+09
      %v1018 = vsel %vm954, %v278, 1e+09
      %v1019 = vsel %vm955, %v279, 1e+09
      %v1020 = vsel %vm956, %v280, 1e+09
      %v1021 = vsel %vm957, %v281, 1e+09
      %v1022 = vsel %vm958, %v282, 1e+09
      %v1023 = vsel %vm959, %v283, 1e+09
      %v1024 = vsel %vm960, %v284, 1e+09
      %v1025 = vsel %vm961, %v285, 1e+09
      %v1026 = vsel %vm962, %v286, 1e+09
      %v1027 = vsel %vm963, %v287, 1e+09
      %v1028 = vsel %vm964, %v288, 1e+09
      %v1029 = vsel %vm965, %v289, 1e+09
      %v1030 = vsel %vm966, %v290, 1e+09
      %v1031 = vsel %vm967, %v291, 1e+09
      %v1032 = vsel %vm968, %v292, 1e+09
      %v1033 = vsel %vm969, %v293, 1e+09
      %v1034 = vsel %vm970, %v294, 1e+09
      %v1035 = vsel %vm971, %v295, 1e+09
      %v1036 = vsel %vm972, %v296, 1e+09
      %v1037 = vsel %vm973, %v297, 1e+09
      %v1038 = vsel %vm974, %v298, 1e+09
      %v1039 = vsel %vm975, %v299, 1e+09
      %v1040 = vsel %vm976, %v300, 1e+09
      %v1041 = vsel %vm977, %v301, 1e+09
      %v1042 = vsel %vm978, %v302, 1e+09
      %v1043 = vsel %vm979, %v303, 1e+09
      %v1044 = vsel %vm980, %v304, 1e+09
      %v1045 = vsel %vm981, %v305, 1e+09
      %v1046 = vsel %vm982, %v306, 1e+09
      %v1047 = vsel %vm983, %v307, 1e+09
      %v1048 = vsel %vm984, %v308, 1e+09
      %v1049 = vsel %vm985, %v309, 1e+09
      %v1050 = vsel %vm986, %v310, 1e+09
      %v1051 = vsel %vm987, %v311, 1e+09
      %v1052 = vsel %vm988, %v312, 1e+09
      %v1053 = vsel %vm989, %v313, 1e+09
      %v1054 = vsel %vm990, %v314, 1e+09
      %v1055 = vsel %vm991, %v315, 1e+09
      %v1056 = vsel %vm992, %v316, 1e+09
      %v1057 = vsel %vm993, %v317, 1e+09
      %v1058 = vsel %vm994, %v318, 1e+09
      %v1059 = vsel %vm995, %v319, 1e+09
      %v1060 = vsel %vm996, %v320, 1e+09
      %v1061 = vsel %vm997, %v321, 1e+09
      %v1062 = vsel %vm998, %v322, 1e+09
      %v1063 = vsel %vm999, %v323, 1e+09
      %v1064 = vsel %vm1000, %v324, 1e+09
      %v1065 = vsel %vm1001, %v325, 1e+09
      %v1066 = vsel %vm1002, %v326, 1e+09
      %v1067 = vsel %vm1003, %v327, 1e+09
      %v1068 = vsel %vm1004, %v328, 1e+09
      %v1069 = vsel %vm1005, %v329, 1e+09
      %v1070 = vsel %vm1006, %v330, 1e+09
      %v1071 = vsel %vm1007, %v331, 1e+09
      %v1072 = vsel %vm1008, %v332, 1e+09
      %v1073 = vsel %vm1009, %v333, 1e+09
      %v1074 = vsel %vm1010, %v334, 1e+09
      %v1075 = vsel %vm1011, %v335, 1e+09
      %v1076 = vsel %vm1012, %v336, 1e+09
      %v1077 = vsel %vm1013, %v337, 1e+09
      %v1078 = vsel %vm1014, %v338, 1e+09
      %v1079 = vmin.f32 %v1015, %v1019
      %v1080 = vmin.f32 %v1017, %v1021
      %v1081 = vmin.f32 %v1079, %v1023
      %v1082 = vmin.f32 %v1080, %v1025
      %v1083 = vmin.f32 %v1081, %v1027
      %v1084 = vmin.f32 %v1082, %v1029
      %v1085 = vmin.f32 %v1083, %v1031
      %v1086 = vmin.f32 %v1084, %v1033
      %v1087 = vmin.f32 %v1085, %v1035
      %v1088 = vmin.f32 %v1086, %v1037
      %v1089 = vmin.f32 %v1087, %v1039
      %v1090 = vmin.f32 %v1088, %v1041
      %v1091 = vmin.f32 %v1089, %v1043
      %v1092 = vmin.f32 %v1090, %v1045
      %v1093 = vmin.f32 %v1091, %v1047
      %v1094 = vmin.f32 %v1092, %v1049
      %v1095 = vmin.f32 %v1093, %v1051
      %v1096 = vmin.f32 %v1094, %v1053
      %v1097 = vmin.f32 %v1095, %v1055
      %v1098 = vmin.f32 %v1096, %v1057
      %v1099 = vmin.f32 %v1097, %v1059
      %v1100 = vmin.f32 %v1098, %v1061
      %v1101 = vmin.f32 %v1099, %v1063
      %v1102 = vmin.f32 %v1100, %v1065
      %v1103 = vmin.f32 %v1101, %v1067
      %v1104 = vmin.f32 %v1102, %v1069
      %v1105 = vmin.f32 %v1103, %v1071
      %v1106 = vmin.f32 %v1104, %v1073
      %v1107 = vmin.f32 %v1105, %v1075
      %v1108 = vmin.f32 %v1106, %v1077
      %v1109 = vmin.f32 %v1107, %v1108
      %v1110 = vrot.slane %v1109, 4
      %v1111 = vmin.f32 %v1109, %v1110
      %v1112 = vrot.slane %v1111, 2
      %v1113 = vmin.f32 %v1111, %v1112
      %v1114 = vrot.slane %v1113, 1
      %v1115 = vmin.f32 %v1113, %v1114
      %v1116 = vmin.f32 %v1016, %v1020
      %v1117 = vmin.f32 %v1018, %v1022
      %v1118 = vmin.f32 %v1116, %v1024
      %v1119 = vmin.f32 %v1117, %v1026
      %v1120 = vmin.f32 %v1118, %v1028
      %v1121 = vmin.f32 %v1119, %v1030
      %v1122 = vmin.f32 %v1120, %v1032
      %v1123 = vmin.f32 %v1121, %v1034
      %v1124 = vmin.f32 %v1122, %v1036
      %v1125 = vmin.f32 %v1123, %v1038
      %v1126 = vmin.f32 %v1124, %v1040
      %v1127 = vmin.f32 %v1125, %v1042
      %v1128 = vmin.f32 %v1126, %v1044
      %v1129 = vmin.f32 %v1127, %v1046
      %v1130 = vmin.f32 %v1128, %v1048
      %v1131 = vmin.f32 %v1129, %v1050
      %v1132 = vmin.f32 %v1130, %v1052
      %v1133 = vmin.f32 %v1131, %v1054
      %v1134 = vmin.f32 %v1132, %v1056
      %v1135 = vmin.f32 %v1133, %v1058
      %v1136 = vmin.f32 %v1134, %v1060
      %v1137 = vmin.f32 %v1135, %v1062
      %v1138 = vmin.f32 %v1136, %v1064
      %v1139 = vmin.f32 %v1137, %v1066
      %v1140 = vmin.f32 %v1138, %v1068
      %v1141 = vmin.f32 %v1139, %v1070
      %v1142 = vmin.f32 %v1140, %v1072
      %v1143 = vmin.f32 %v1141, %v1074
      %v1144 = vmin.f32 %v1142, %v1076
      %v1145 = vmin.f32 %v1143, %v1078
      %v1146 = vmin.f32 %v1144, %v1145
      %v1147 = vrot.slane %v1146, 4
      %v1148 = vmin.f32 %v1146, %v1147
      %v1149 = vrot.slane %v1148, 2
      %v1150 = vmin.f32 %v1148, %v1149
      %v1151 = vrot.slane %v1150, 1
      %v1152 = vmin.f32 %v1150, %v1151
      %v1153 = vsel %vm743, %v947, -inf
      %v1154 = vsel %vm743, %v948, -inf
      %v1155 = vmax.f32 %v1153, %v1154
      %1156 = vmax.xlane.f32.xlu0 %v1155
      %v1157 = vpop.xlane.xlu0 %1156
      %v1158 = vmul.f32 %v1115, %v1157
      %v1159 = vmul.f32 %v1152, %v1157
      %v1160 = vadd.f32 %v749, %v1158
      %v1161 = vadd.f32 %v750, %v1159
      %v1162 = vsub.f32 %v339, %v340
      %v1163 = vmul.f32 %v1162, %v1162
      %v1166 = vrot.slane %v1161, 7
      %v1167 = vsel %vm743, %v1160, %v1166
      %v1169 = vmul.f32 %v1163, %v1167
      %v1171 = vperm.slane %v1169, 0
      %v1172 = vperm.slane %v1169, 1
      %v1175 = vsel %vm743, %v1171, 0.0
      %v1176 = vsel %vm743, %v1172, 0.0
      %v1177 = vadd.f32 %v1175, %v1176
      %1178 = vadd.xlane.f32.xlu0 %v1177
      %v1179 = vpop.xlane.xlu0 %1178
      %vm1180 = vcmask 0
      %1181 = vst.msk [vmem:[%s274] sm:$0x1] %vm1180, %v1179
      %p1182 = scmp.lt.s32.totalorder %s16, 1
      %s1183 = scalar_select %p1182, %s16, 1
      %s1184 = scalar_lea.vmem %s5, %s1183
      // Predicated region
      $region41: #{hausdorff_dt_loss.1} parent=39 // pred_check
        %p1185 = pneg %p159
      $region42: #{hausdorff_dt_loss.1} parent=39 // pred_check_branch
        %1187 = sbr.rel (%p1185) target = $region44
      $region43: #{hausdorff_dt_loss.1} parent=39 // pred_region
        _
      $region44: #{hausdorff_dt_loss.1} parent=39 // pred_fallthru
        _
    $region40: #{hausdorff_dt_loss.1} parent=5 // pred_fallthru
      _
    %p1188 = scmp.le.s32.totalorder 2, %s11
    // Predicated region
    $region45: #{hausdorff_dt_loss.1} parent=5 // pred_check
      %p1189 = pneg %p1188
    $region46: #{hausdorff_dt_loss.1} parent=5 // pred_check_branch
      %1191 = sbr.rel (%p1189) target = $region48
    $region47: #{hausdorff_dt_loss.1} parent=5 // pred_region
      %s1192 = ssub.s32 %s11, 2
      // Predicated region
      $region49: #{hausdorff_dt_loss.1} parent=47 // pred_check
        %p1193 = pneg %p165
      $region50: #{hausdorff_dt_loss.1} parent=47 // pred_check_branch
        %1195 = sbr.rel (%p1193) target = $region52
      $region51: #{hausdorff_dt_loss.1} parent=47 // pred_region
        %p1196 = scmp.lt.s32.totalorder %s17, 1
        %s1197 = scalar_select %p1196, %s17, 1
        %s1198 = scalar_lea.vmem %s5, %s1197
      $region52: #{hausdorff_dt_loss.1} parent=47 // pred_fallthru
        _
    $region48: #{hausdorff_dt_loss.1} parent=5 // pred_fallthru
      _
  $region6: #{hausdorff_dt_loss.1} parent=0 // loop_footer
    %s15 = sadd.s32 1, %s11
  $region7: #{hausdorff_dt_loss.1} parent=0 // loop_footer_branch
    %10 = sbr.rel target = $region3
  $region8: #{hausdorff_dt_loss.1} parent=0 // loop_exit
    _

</llo_original>
